<compile_context>
chip_gen: v5e
topology: v5e:2x2
jax: 0.10.0
libtpu: 0.0.40
codegen_flags: <defaults>
</compile_context>

<pallas_src>
import jax
import jax.numpy as jnp
from jax.experimental import pallas as pl
from jax.experimental.pallas import tpu as pltpu


DEFAULT_TILE_H = 1024   # reduction-axis tile (multiple of 128)
DEFAULT_TILE_C = 1024   # output-class tile  (multiple of 128)


def _round_up(x, m):
    return ((x + m - 1) // m) * m


def _tiles(H, C, tile_h, tile_c):
    tH = min(tile_h, _round_up(H, 128))
    H_pad = _round_up(H, tH)
    tC = min(tile_c, _round_up(C, 128))
    C_pad = _round_up(C, tC)
    # v7x megacore: the C axis is the only shardable axis (H is the
    # reduction).  If the padded class dim allows it, make sure there are at
    # least 2 C tiles so the second TensorCore is not idle.
    if C_pad // tC < 2 and C_pad >= 256:
        start = (C_pad // 2) // 128 * 128
        for cand in range(start, 0, -128):
            if C_pad % cand == 0:
                tC = cand
                break
    return tH, H_pad, tC, C_pad


def prepare_classify_params(weight, bias, *,
                            tile_h=DEFAULT_TILE_H,
                            tile_c=DEFAULT_TILE_C,
                            compute_dtype=jnp.bfloat16):
    """One-time (init) parameter prep.

    weight: [C, H]  (PyTorch nn.Linear layout)
    bias:   [C]

    Returns (w_panels, b2, meta):
      w_panels: [nC, H_pad, tC] compute_dtype — pre-transposed, zero-padded,
                pre-blocked into contiguous column panels so each grid step's
                weight DMA is one contiguous slab.
      b2:       [1, C_pad] float32
      meta:     (C, H, tH, tC, H_pad, C_pad)
    """
    C, H = weight.shape
    tH, H_pad, tC, C_pad = _tiles(H, C, tile_h, tile_c)
    nC = C_pad // tC
    w_hc = jnp.pad(weight.T, ((0, H_pad - H), (0, C_pad - C))).astype(compute_dtype)
    w_panels = w_hc.reshape(H_pad, nC, tC).transpose(1, 0, 2)   # [nC, H_pad, tC]
    b2 = jnp.pad(bias.astype(jnp.float32), (0, C_pad - C)).reshape(1, C_pad)
    return w_panels, b2, (C, H, tH, tC, H_pad, C_pad)


def _classify_kernel(x_ref, w_ref, b_ref, o_ref, acc_ref):
    # grid = (nC, nH); axis 1 (H) is the reduction axis.
    # x_ref: [B_pad, H_pad] (fully resident — constant index_map)
    # w_ref: [tH, tC] contiguous weight slab (panel dim squeezed)
    # b_ref: [1, tC]   o_ref: [B_pad, tC]   acc_ref: [B_pad, tC] f32 scratch
    k = pl.program_id(1)
    tH = w_ref.shape[0]

    @pl.when(k == 0)
    def _():
        acc_ref[...] = jnp.zeros_like(acc_ref)

    h0 = pl.multiple_of(k * tH, 128)
    acc_ref[...] += jnp.dot(x_ref[:, pl.ds(h0, tH)], w_ref[...],
                            preferred_element_type=jnp.float32)

    @pl.when(k == pl.num_programs(1) - 1)
    def _():
        o_ref[...] = (acc_ref[...] + b_ref[...]).astype(o_ref.dtype)


def classify_forward(dense_x, w_panels, b2, meta):
    """dense_x: [B, S, H]; w_panels/b2/meta from prepare_classify_params."""
    C, H, tH, tC, H_pad, C_pad = meta
    B, S, _ = dense_x.shape

    # Only token 0 ever enters the kernel (S-fold less activation DMA).
    x0 = dense_x[:, 0, :]                                   # [B, H]

    # Pad B to 16 (bf16 sublane packing: one bf16 vreg holds [16, 128]) and H
    # to the padded weight rows; zero padding keeps the dot exact.
    B_pad = _round_up(max(B, 16), 16)
    x0 = jnp.pad(x0, ((0, B_pad - B), (0, H_pad - H))).astype(w_panels.dtype)

    nC, nH = C_pad // tC, H_pad // tH
    grid = (nC, nH)   # (classes, reduction) — reduction last

    out = pl.pallas_call(
        _classify_kernel,
        out_shape=jax.ShapeDtypeStruct((B_pad, C_pad), dense_x.dtype),
        grid_spec=pltpu.PrefetchScalarGridSpec(
            num_scalar_prefetch=0,
            grid=grid,
            in_specs=[
                # Activation fully resident: constant index_map -> DMA'd once,
                # never re-fetched across grid steps.
                pl.BlockSpec((B_pad, H_pad), lambda j, k: (0, 0)),
                # Contiguous weight panel slab [tH, tC] (panel dim squeezed).
                pl.BlockSpec((None, tH, tC), lambda j, k: (j, k, 0)),
                # Bias tile.
                pl.BlockSpec((1, tC), lambda j, k: (0, j)),
            ],
            out_specs=pl.BlockSpec((B_pad, tC), lambda j, k: (0, j)),
            scratch_shapes=[pltpu.VMEM((B_pad, tC), jnp.float32)],
        ),
        compiler_params=pltpu.CompilerParams(
            dimension_semantics=("parallel", "arbitrary"),
        ),
    )(x0, w_panels, b2)

    return out[:B, :C]


def classify_reference_f32(dense_x, weight, bias):
    return dense_x[:, 0, :] @ weight.T + bias


def classify_reference_bf16(dense_x, weight, bias):
    # Mirrors kernel arithmetic: bf16 inputs, f32 accumulate, f32 bias add.
    x0 = dense_x[:, 0, :].astype(jnp.bfloat16).astype(jnp.float32)
    w = weight.T.astype(jnp.bfloat16).astype(jnp.float32)
    return x0 @ w + bias


if __name__ == "__main__":
    # Small shapes consistent with the module's forward: [B, S, H] -> [B, C]
    B, S, H, C = 2, 8, 32, 8

    key = jax.random.PRNGKey(0)
    kx, kw, kb = jax.random.split(key, 3)

    dense_x = jax.random.normal(kx, (B, S, H), dtype=jnp.float32)
    # Deterministic parameter init mimicking nn.Linear's uniform(-1/sqrt(H), 1/sqrt(H))
    bound = 1.0 / jnp.sqrt(jnp.float32(H))
    weight = jax.random.uniform(kw, (C, H), dtype=jnp.float32,
                                minval=-bound, maxval=bound)
    bias = jax.random.uniform(kb, (C,), dtype=jnp.float32,
                              minval=-bound, maxval=bound)

    # One-time parameter prep (transpose / pad / panel-block / bf16 cast).
    w_panels, b2, meta = prepare_classify_params(weight, bias)
    out = classify_forward(dense_x, w_panels, b2, meta)
    out = jax.block_until_ready(out)

    assert out.shape == (B, C)

    ref_bf16 = classify_reference_bf16(dense_x, weight, bias)
    ref_f32 = classify_reference_f32(dense_x, weight, bias)
    assert jnp.allclose(out, ref_bf16, atol=1e-4, rtol=1e-4), \
        "mismatch vs bf16-accumulation reference"
    assert jnp.allclose(out, ref_f32, atol=3e-2, rtol=3e-2), \
        "mismatch vs f32 reference (beyond bf16 rounding)"

    print("KERNEL_OK")
</pallas_src>

<mosaic_0001>
module attributes {stable_mosaic.version = 11 : i64} {
  func.func @_classify_kernel(%arg0: i32, %arg1: i32, %arg2: memref<16x128xbf16, #tpu.memory_space<vmem>>, %arg3: memref<1x128x128xbf16, #tpu.memory_space<vmem>>, %arg4: memref<1x128xf32, #tpu.memory_space<vmem>>, %arg5: memref<16x128xf32, #tpu.memory_space<vmem>>, %arg6: memref<16x128xf32, #tpu.memory_space<vmem>>) attributes {dimension_semantics = [#tpu.dimension_semantics<parallel>, #tpu.dimension_semantics<arbitrary>], iteration_bounds = array<i64: 1, 1>, scalar_prefetch = 0 : i64, scratch_operands = 1 : i64, tpu.core_type = #tpu.core_type<tc>, window_params = [{pipeline_mode = #tpu.pipeline_mode<synchronous>, transform_indices = @transform_0, window_bounds = array<i64: 16, 128>}, {transform_indices = @transform_1, window_bounds = array<i64: 1, 128, 128>}, {transform_indices = @transform_2, window_bounds = array<i64: 1, 128>}, {transform_indices = @transform_3, window_bounds = array<i64: 16, 128>}]} {
    %c0_i32 = arith.constant 0 : i32
    %0 = arith.cmpi eq, %arg1, %c0_i32 : i32
    %1 = arith.extui %0 : i1 to i32
    %c0_i32_0 = arith.constant 0 : i32
    %2 = arith.cmpi ne, %1, %c0_i32_0 : i32
    scf.if %2 {
      %cst_10 = arith.constant 0.000000e+00 : f32
      %16 = vector.broadcast %cst_10 : f32 to vector<16x128xf32>
      %c0_11 = arith.constant 0 : index
      %c0_12 = arith.constant 0 : index
      %17 = vector.load %arg6[%c0_11, %c0_12] : memref<16x128xf32, #tpu.memory_space<vmem>>, vector<16x128xf32>
      tpu.vector_store %arg6[%c0_11, %c0_12], %16 {strides = array<i32>} : memref<16x128xf32, #tpu.memory_space<vmem>>, vector<16x128xf32>,
    } else {
    }
    %c128_i32 = arith.constant 128 : i32
    %3 = arith.muli %arg1, %c128_i32 : i32
    %4 = tpu.assume_multiple %3, 128 : i32
    %c0 = arith.constant 0 : index
    %c0_1 = arith.constant 0 : index
    %5 = vector.load %arg6[%c0, %c0_1] : memref<16x128xf32, #tpu.memory_space<vmem>>, vector<16x128xf32>
    %c0_2 = arith.constant 0 : index
    %6 = arith.index_cast %4 : i32 to index
    %7 = vector.load %arg2[%c0_2, %6] : memref<16x128xbf16, #tpu.memory_space<vmem>>, vector<16x128xbf16>
    %c0_3 = arith.constant 0 : index
    %c0_4 = arith.constant 0 : index
    %c0_5 = arith.constant 0 : index
    %8 = vector.load %arg3[%c0_3, %c0_4, %c0_5] : memref<1x128x128xbf16, #tpu.memory_space<vmem>>, vector<1x128x128xbf16>
    %9 = vector.shape_cast %8 : vector<1x128x128xbf16> to vector<128x128xbf16>
    %cst = arith.constant dense<0.000000e+00> : vector<16x128xf32>
    %10 = tpu.matmul %7, %9, %cst {dimension_numbers = #tpu.dot_dimension_numbers<[1], [0], [0], [1], [0, 0, 1, 1], [], []>} : vector<16x128xbf16>, vector<128x128xbf16>, vector<16x128xf32> -> vector<16x128xf32>
    %11 = arith.addf %5, %10 : vector<16x128xf32>
    %c0_6 = arith.constant 0 : index
    %c0_7 = arith.constant 0 : index
    %12 = vector.load %arg6[%c0_6, %c0_7] : memref<16x128xf32, #tpu.memory_space<vmem>>, vector<16x128xf32>
    tpu.vector_store %arg6[%c0_6, %c0_7], %11 {strides = array<i32>} : memref<16x128xf32, #tpu.memory_space<vmem>>, vector<16x128xf32>,
    %c0_i32_8 = arith.constant 0 : i32
    %13 = arith.cmpi eq, %arg1, %c0_i32_8 : i32
    %14 = arith.extui %13 : i1 to i32
    %c0_i32_9 = arith.constant 0 : i32
    %15 = arith.cmpi ne, %14, %c0_i32_9 : i32
    scf.if %15 {
      %c0_10 = arith.constant 0 : index
      %c0_11 = arith.constant 0 : index
      %16 = vector.load %arg6[%c0_10, %c0_11] : memref<16x128xf32, #tpu.memory_space<vmem>>, vector<16x128xf32>
      %c0_12 = arith.constant 0 : index
      %c0_13 = arith.constant 0 : index
      %17 = vector.load %arg4[%c0_12, %c0_13] : memref<1x128xf32, #tpu.memory_space<vmem>>, vector<1x128xf32>
      %18 = vector.broadcast %17 : vector<1x128xf32> to vector<16x128xf32>
      %19 = arith.addf %16, %18 : vector<16x128xf32>
      %c0_14 = arith.constant 0 : index
      %c0_15 = arith.constant 0 : index
      %20 = vector.load %arg5[%c0_14, %c0_15] : memref<16x128xf32, #tpu.memory_space<vmem>>, vector<16x128xf32>
      tpu.vector_store %arg5[%c0_14, %c0_15], %19 {strides = array<i32>} : memref<16x128xf32, #tpu.memory_space<vmem>>, vector<16x128xf32>,
    } else {
    }
    return
  }
  func.func @transform_0(%arg0: i32, %arg1: i32) -> (i32, i32) {
    %c0_i32 = arith.constant 0 : i32
    %c0_i32_0 = arith.constant 0 : i32
    %c0_i32_1 = arith.constant 0 : i32
    return %c0_i32, %c0_i32_0 : i32, i32
  }
  func.func @transform_1(%arg0: i32, %arg1: i32) -> (i32, i32, i32) {
    %c0_i32 = arith.constant 0 : i32
    %c0_i32_0 = arith.constant 0 : i32
    return %arg0, %arg1, %c0_i32 : i32, i32, i32
  }
  func.func @transform_2(%arg0: i32, %arg1: i32) -> (i32, i32) {
    %c0_i32 = arith.constant 0 : i32
    %c0_i32_0 = arith.constant 0 : i32
    return %c0_i32, %arg0 : i32, i32
  }
  func.func @transform_3(%arg0: i32, %arg1: i32) -> (i32, i32) {
    %c0_i32 = arith.constant 0 : i32
    %c0_i32_0 = arith.constant 0 : i32
    return %c0_i32, %arg0 : i32, i32
  }
}

</mosaic_0001>

<llo_original>
// kernel: tpu_custom_call.1
$region0: #{tpu_custom_call.1}
  #allocation0 [shape = 'u32[]', space=smem, size = 0x4, offset = 0x4, fixed_abs, tag = 'smem constant byte address 0x4 - core index']
  #allocation1 [shape = 'u32[72,128]{1,0:T(1,128)}', space=vmem, size = 0x9000, scoped, tag = 'internal scratch']
  #allocation2 [shape = 'f32[16,128]{1,0:T(8,128)}', space=vmem, size = 0x2000, scoped, tag = 'scratch operand']
  %s0 = inlined_call_operand.hbm [shape: bf16[16,128], index: 0, kind: input, shape index: {}]
  %s1 = inlined_call_operand.hbm [shape: bf16[1,128,128], index: 1, kind: input, shape index: {}]
  %s2 = inlined_call_operand.vmem [shape: f32[1,128], index: 2, kind: input, shape index: {}]
  %s3 = inlined_call_operand.hbm [shape: f32[16,128], index: 3, kind: output, shape index: {}]
  %s4 = sld [smem:[#allocation0]]
  $region38: #{tpu_custom_call.1} parent=0
    _
  %s6 = ssub.s32 1, %s4
  %s7 = scalar_select 0, %s6, %s4
  $region1: #{tpu_custom_call.1} parent=0
    #allocation3 [shape = 'u8[4096]{0}', space=vmem, size = 0x1000, scoped, tag = 'input window, operand 0, single buffered']
    #allocation4 [shape = 's32[1]{0}', space=sflag, size = 0x4, scoped, tag = 'scoped memory for tpu_custom_call.1']
    #allocation5 [shape = 's32[1]{0}', space=sflag, size = 0x4, scoped, tag = 'scoped memory for tpu_custom_call.1']
    #allocation6 [shape = 'u8[32768]{0}', space=vmem, size = 0x8000, scoped, tag = 'input window, operand 1, single buffered']
    #allocation7 [shape = 's32[1]{0}', space=sflag, size = 0x4, scoped, tag = 'scoped memory for tpu_custom_call.1']
    #allocation8 [shape = 'u8[8192]{0}', space=vmem, size = 0x2000, scoped, tag = 'output window, operand 0, single buffered']
    %8 = vsyncpa [#allocation4], 0
    %9 = vsyncpa [#allocation7], 0
    %10 = vsyncpa [#allocation5], 0
    // Predicated region
    $region2: #{tpu_custom_call.1} parent=1 // pred_check
      _
    $region3: #{tpu_custom_call.1} parent=1 // pred_check_branch
      %12 = sbr.rel (0) target = $region5
    $region4: #{tpu_custom_call.1} parent=1 // pred_region
      %14 = vsyncadd [#allocation4], 0
      %s15 = sshll.u32 %s0, 4
      %s16 = int_to_ptr.hbm [resolvable:$true] %s15
      %s17 = sshll.u32 [#allocation3], 4
      %s18 = int_to_ptr.vmem [resolvable:$true] %s17
      %23 = dma.hbm_to_vmem [thread:$0]  %s16, 128, %s18, [#allocation4], 64, 64, 4
    $region5: #{tpu_custom_call.1} parent=1 // pred_fallthru
      _
    // Predicated region
    $region6: #{tpu_custom_call.1} parent=1 // pred_check
      _
    $region7: #{tpu_custom_call.1} parent=1 // pred_check_branch
      %25 = sbr.rel (0) target = $region9
    $region8: #{tpu_custom_call.1} parent=1 // pred_region
      %27 = vsyncadd [#allocation7], 0
      %s28 = sshll.u32 %s1, 4
      %s29 = int_to_ptr.hbm [resolvable:$true] %s28
      %s30 = sshll.u32 [#allocation6], 4
      %s31 = int_to_ptr.vmem [resolvable:$true] %s30
      %36 = dma.hbm_to_vmem [thread:$0]  %s29, 1024, %s31, [#allocation7], 64, 64, 4
    $region9: #{tpu_custom_call.1} parent=1 // pred_fallthru
      _
    // Predicated region
    $region10: #{tpu_custom_call.1} parent=1 // pred_check
      _
    $region11: #{tpu_custom_call.1} parent=1 // pred_check_branch
      %38 = sbr.rel (0) target = $region13
    $region12: #{tpu_custom_call.1} parent=1 // pred_region
      _
    $region13: #{tpu_custom_call.1} parent=1 // pred_fallthru
      _
    // Predicated region
    $region14: #{tpu_custom_call.1} parent=1 // pred_check
      _
    $region15: #{tpu_custom_call.1} parent=1 // pred_check_branch
      %40 = sbr.rel (0) target = $region17
    $region16: #{tpu_custom_call.1} parent=1 // pred_region
      %42 = dma.done [#allocation4], 128
    $region17: #{tpu_custom_call.1} parent=1 // pred_fallthru
      _
    // Predicated region
    $region18: #{tpu_custom_call.1} parent=1 // pred_check
      _
    $region19: #{tpu_custom_call.1} parent=1 // pred_check_branch
      %44 = sbr.rel (0) target = $region21
    $region20: #{tpu_custom_call.1} parent=1 // pred_region
      %46 = dma.done [#allocation7], 1024
    $region21: #{tpu_custom_call.1} parent=1 // pred_fallthru
      _
    %p47 = scmp.eq.s32.totalorder 0, 0
    // Predicated region
    $region22: #{tpu_custom_call.1} parent=1 // pred_check
      %p48 = pneg %p47
    $region23: #{tpu_custom_call.1} parent=1 // pred_check_branch
      %50 = sbr.rel (%p48) target = $region25
    $region24: #{tpu_custom_call.1} parent=1 // pred_region
      %51 = vst [vmem:[#allocation2] sm:$0xff] 0.0
      %52 = vst [vmem:[#allocation2 + $0x8] sm:$0xff] 0.0
    $region25: #{tpu_custom_call.1} parent=1 // pred_fallthru
      _
    %s53 = smul.u32 0, 128
    %v54 = vld [vmem:[#allocation2] sm:$0xff]
    %v55 = vld [vmem:[#allocation2 + $0x8] sm:$0xff]
    %s56 = sshra.s32 %s53, 7
    %s57 = sand.u32 %s53, 127
    %s58 = smul.addr %s56, 4
    %s59 = scalar_lea.vmem [#allocation3], %s58
    %v60 = vld [vmem:[%s59] sm:$0xf]
    %v61 = vld [vmem:[%s59 + $0x4] sm:$0xf]
    %v62 = vld [vmem:[#allocation6] sm:$0xf]
    %v63 = vld [vmem:[#allocation6 + $0x4] sm:$0xf]
    %v64 = vld [vmem:[#allocation6 + $0x8] sm:$0xf]
    %v65 = vld [vmem:[#allocation6 + $0xc] sm:$0xf]
    %v66 = vld [vmem:[#allocation6 + $0x10] sm:$0xf]
    %v67 = vld [vmem:[#allocation6 + $0x14] sm:$0xf]
    %v68 = vld [vmem:[#allocation6 + $0x18] sm:$0xf]
    %v69 = vld [vmem:[#allocation6 + $0x1c] sm:$0xf]
    %v70 = vld [vmem:[#allocation6 + $0x20] sm:$0xf]
    %v71 = vld [vmem:[#allocation6 + $0x24] sm:$0xf]
    %v72 = vld [vmem:[#allocation6 + $0x28] sm:$0xf]
    %v73 = vld [vmem:[#allocation6 + $0x2c] sm:$0xf]
    %v74 = vld [vmem:[#allocation6 + $0x30] sm:$0xf]
    %v75 = vld [vmem:[#allocation6 + $0x34] sm:$0xf]
    %v76 = vld [vmem:[#allocation6 + $0x38] sm:$0xf]
    %v77 = vld [vmem:[#allocation6 + $0x3c] sm:$0xf]
    %v80 = vunpack.c.l.b16 %v60
    %v81 = vunpack.c.l.b16 %v61
    %v82 = vpack.c.b16 %v81, %v80
    %v100 = vunpack.c.l.b16 %v62
    %v101 = vunpack.c.l.b16 %v63
    %v102 = vunpack.c.l.b16 %v64
    %v103 = vunpack.c.l.b16 %v65
    %v104 = vunpack.c.l.b16 %v66
    %v105 = vunpack.c.l.b16 %v67
    %v106 = vunpack.c.l.b16 %v68
    %v107 = vunpack.c.l.b16 %v69
    %v108 = vunpack.c.l.b16 %v70
    %v109 = vunpack.c.l.b16 %v71
    %v110 = vunpack.c.l.b16 %v72
    %v111 = vunpack.c.l.b16 %v73
    %v112 = vunpack.c.l.b16 %v74
    %v113 = vunpack.c.l.b16 %v75
    %v114 = vunpack.c.l.b16 %v76
    %v115 = vunpack.c.l.b16 %v77
    %v116 = vpack.c.b16 %v101, %v100
    %v117 = vpack.c.b16 %v103, %v102
    %v118 = vpack.c.b16 %v105, %v104
    %v119 = vpack.c.b16 %v107, %v106
    %v120 = vpack.c.b16 %v109, %v108
    %v121 = vpack.c.b16 %v111, %v110
    %v122 = vpack.c.b16 %v113, %v112
    %v123 = vpack.c.b16 %v115, %v114
    %132 = vmatpush.bf16.msra.mxu0 %v123
    %133 = vmatpush.bf16.msra.mxu0 %v122
    %134 = vmatpush.bf16.msra.mxu0 %v121
    %135 = vmatpush.bf16.msra.mxu0 %v120
    %136 = vmatpush.bf16.msra.mxu0 %v119
    %137 = vmatpush.bf16.msra.mxu0 %v118
    %138 = vmatpush.bf16.msra.mxu0 %v117
    %139 = vmatpush.bf16.msra.mxu0 %v116
    %140 = vmatmul.bf16.gmra.mxu0 %v82
    %v141 = vpop.f32.mrf.mxu0
    %v142 = vadd.f32 0.0, %v141
    %v143 = vpop.f32.mrf.mxu0
    %v144 = vadd.f32 0.0, %v143
    %145 = vdwg.mxu0
    %v146 = vadd.f32 %v54, %v142
    %v147 = vadd.f32 %v55, %v144
    %148 = vst [vmem:[#allocation2] sm:$0xff] %v146
    %149 = vst [vmem:[#allocation2 + $0x8] sm:$0xff] %v147
    // Predicated region
    $region26: #{tpu_custom_call.1} parent=1 // pred_check
      %p150 = pneg %p47
    $region27: #{tpu_custom_call.1} parent=1 // pred_check_branch
      %152 = sbr.rel (%p150) target = $region29
    $region28: #{tpu_custom_call.1} parent=1 // pred_region
      %v153 = vld [vmem:[#allocation2] sm:$0xff]
      %v154 = vld [vmem:[#allocation2 + $0x8] sm:$0xff]
      %v155 = vld [vmem:[%s2] sm:$0x1]
      %v157 = vperm.slane %v155, 0
      %v159 = vadd.f32 %v153, %v157
      %v160 = vadd.f32 %v154, %v157
      %161 = vst [vmem:[#allocation8] sm:$0xff] %v159
      %162 = vst [vmem:[#allocation8 + $0x8] sm:$0xff] %v160
    $region29: #{tpu_custom_call.1} parent=1 // pred_fallthru
      _
    // Predicated region
    $region30: #{tpu_custom_call.1} parent=1 // pred_check
      _
    $region31: #{tpu_custom_call.1} parent=1 // pred_check_branch
      %164 = sbr.rel (0) target = $region33
    $region32: #{tpu_custom_call.1} parent=1 // pred_region
      %166 = vsyncadd [#allocation5], 0
      %s167 = sshll.u32 [#allocation8], 4
      %s168 = int_to_ptr.vmem [resolvable:$true] %s167
      %s169 = sshll.u32 %s3, 4
      %s170 = int_to_ptr.hbm [resolvable:$true] %s169
      %175 = dma.vmem_to_hbm [thread:$0]  %s168, 256, %s170, [#allocation5], 128, 128, 8
    $region33: #{tpu_custom_call.1} parent=1 // pred_fallthru
      _
    // Predicated region
    $region34: #{tpu_custom_call.1} parent=1 // pred_check
      _
    $region35: #{tpu_custom_call.1} parent=1 // pred_check_branch
      %177 = sbr.rel (0) target = $region37
    $region36: #{tpu_custom_call.1} parent=1 // pred_region
      %179 = dma.done [#allocation5], 256
    $region37: #{tpu_custom_call.1} parent=1 // pred_fallthru
      _
    %180 = vsyncpa [#allocation4], 1
    %181 = vsyncpa [#allocation7], 1
    %182 = vsyncpa [#allocation5], 1

</llo_original>
